<compile_context>
chip_gen: v5e
topology: v5e:2x2
jax: 0.10.0
libtpu: 0.0.40
codegen_flags: <defaults>
</compile_context>

<pallas_src>
import functools

import jax
import jax.numpy as jnp
from jax.experimental import pallas as pl
from jax.experimental.pallas import tpu as pltpu


def _sample_gather_kernel(idx_ref, p_ref, o_ref):
    """idx_ref: (nums, TL) int32     -- sampled kernel offset per (sample, position)
       p_ref:   (K*c, TL)  x.dtype   -- unfolded patches, row = k*c + ch (dense slab)
       o_ref:   (c*nums, TL) x.dtype -- row = ch*nums + s

       o[ch*nums+s, t] = p[idx[s,t]*c + ch, t], realised as a K-step select
       chain in the native dtype (exactly one k matches per element).
    """
    nums, TL = idx_ref.shape
    c = o_ref.shape[0] // nums
    K = p_ref.shape[0] // c

    idx = idx_ref[...]                                   # (nums, TL) int32
    # Hoisted broadcast to the output-row shape (row ch*nums+s -> idx[s]).
    if nums == 1:
        idx_b = jnp.broadcast_to(idx, (c, TL))
    else:
        idx_b = jnp.tile(idx, (c, 1))

    def rows(k):
        r = p_ref[pl.ds(k * c, c), :]                    # (c, TL) contiguous slab
        return r if nums == 1 else jnp.repeat(r, nums, axis=0)

    acc = rows(0)                                        # k == 0 is the default
    for k in range(1, K):                                # K small & static -> unrolled
        acc = jnp.where(idx_b == k, rows(k), acc)
    o_ref[...] = acc


def _pick_lane_tile(L, K, c, nums, itemsize, budget_bytes=16 << 20):
    """Largest lane tile (multiple of 128) whose double-buffered working set
    fits a conservative VMEM budget, without over-padding tiny inputs, and
    keeping >=2 grid steps (v7x megacore) once L is big enough."""
    Lp128 = ((L + 127) // 128) * 128
    for t in (4096, 2048, 1024, 512, 256, 128):
        if t > Lp128:
            continue                                     # don't over-pad tiny L
        per_step = 2 * t * ((K * c + c * nums) * itemsize + nums * 4)
        if per_step > budget_bytes:
            continue
        if Lp128 >= 256 and pl.cdiv(Lp128, t) < 2:
            continue                                     # keep >=2 tiles for megacore
        return t
    return 128


def _unfold(x0, kh, kw, stride):
    """General nn.Unfold on a single image: x0 (c, h, w) -> (c, kh*kw, L),
    row-major kernel offsets / row-major output positions (matches torch)."""
    c, h, w = x0.shape
    fh = (h - kh) // stride + 1
    fw = (w - kw) // stride + 1
    rows = (jnp.arange(fh) * stride)[:, None] + jnp.arange(kh)[None, :]   # (fh, kh)
    cols = (jnp.arange(fw) * stride)[:, None] + jnp.arange(kw)[None, :]   # (fw, kw)
    p = x0[:, rows[:, None, :, None], cols[None, :, None, :]]             # (c, fh, fw, kh, kw)
    p = p.transpose(0, 3, 4, 1, 2).reshape(c, kh * kw, fh * fw)           # (c, K, L)
    return p, fh, fw


@functools.partial(jax.jit, static_argnames=("nums", "kernel_size", "stride"))
def sparse_random_sampling(x, key, *, nums=1, kernel_size=(4, 4), stride=4):
    """Returns (out, idx):
       out: (1, c, feature_h*feature_w*nums)  -- matches the PyTorch module
       idx: (nums, L) int32 sampled kernel offsets (for reference checking)."""
    b, c, h, w = x.shape
    assert b == 1, "reference module's final .view(1, c, L*nums) requires batch==1"
    kh, kw = kernel_size
    K = kh * kw
    fh = (h - kh) // stride + 1
    fw = (w - kw) // stride + 1
    L = fh * fw

    # --- unfold, produced directly in the (K*c, L) kernel layout -------------
    if kh == stride and kw == stride:
        # Non-overlapping patches: pure reshape/transpose, no gather HLO.
        p = x[0, :, :fh * kh, :fw * kw].reshape(c, fh, kh, fw, kw)
        pk = p.transpose(2, 4, 0, 1, 3).reshape(K * c, L)       # row = k*c + ch
    else:
        p, _, _ = _unfold(x[0], kh, kw, stride)                 # (c, K, L) fallback
        pk = p.transpose(1, 0, 2).reshape(K * c, L)

    # --- per-position uniform sampling WITHOUT replacement (JAX glue) --------
    if nums == 1:
        idx = jax.random.randint(key, (1, L), 0, K, dtype=jnp.int32)
    else:
        # argsort of iid uniform noise == uniform random permutation / position
        noise = jax.random.uniform(key, (L, K))
        idx = jnp.argsort(noise, axis=-1)[:, :nums].T.astype(jnp.int32)   # (nums, L)

    # --- lane tiling ----------------------------------------------------------
    itemsize = jnp.dtype(x.dtype).itemsize
    TL = _pick_lane_tile(L, K, c, nums, itemsize)
    Lp = pl.cdiv(L, TL) * TL
    if Lp != L:
        pk = jnp.pad(pk, ((0, 0), (0, Lp - L)))
        idx_p = jnp.pad(idx, ((0, 0), (0, Lp - L)))
    else:
        idx_p = idx
    grid = (Lp // TL,)

    out = pl.pallas_call(
        _sample_gather_kernel,
        out_shape=jax.ShapeDtypeStruct((c * nums, Lp), x.dtype),
        grid_spec=pltpu.PrefetchScalarGridSpec(
            num_scalar_prefetch=0,
            grid=grid,
            in_specs=[
                pl.BlockSpec((nums, TL), lambda lt: (0, lt)),
                pl.BlockSpec((K * c, TL), lambda lt: (0, lt)),
            ],
            out_specs=pl.BlockSpec((c * nums, TL), lambda lt: (0, lt)),
        ),
        compiler_params=pltpu.CompilerParams(
            dimension_semantics=("parallel",),      # independent L tiles -> v7x megacore
            vmem_limit_bytes=32 << 20,
        ),
        cost_estimate=pl.CostEstimate(
            flops=2 * K * c * nums * Lp,
            transcendentals=0,
            bytes_accessed=(K * c + c * nums) * Lp * itemsize + nums * Lp * 4,
        ),
    )(idx_p, pk)

    out = out.reshape(c, nums, Lp)[:, :, :L]        # drop lane padding
    out = out.transpose(0, 2, 1).reshape(1, c, L * nums)   # L-major, nums-minor (torch order)
    return out, idx


if __name__ == "__main__":
    key = jax.random.PRNGKey(0)
    k_data, k_idx = jax.random.split(key)

    # Small shapes consistent with the module (batch must be 1, see assert).
    b, c, h, w = 1, 4, 16, 16
    nums, kernel_size, stride = 1, (4, 4), 4
    x = jax.random.normal(k_data, (b, c, h, w), dtype=jnp.float32)

    out, idx = sparse_random_sampling(
        x, k_idx, nums=nums, kernel_size=kernel_size, stride=stride
    )
    out = jax.block_until_ready(out)

    # --- reference check (plain JAX index-based unfold, same sampled indices) ---
    kh, kw = kernel_size
    p_ref, fh, fw = _unfold(x[0], kh, kw, stride)        # (c, K, L)
    L = fh * fw
    gathered = p_ref[:, idx, jnp.arange(L)[None, :]]     # (c, nums, L): p[c, idx[s,l], l]
    ref = gathered.transpose(0, 2, 1).reshape(1, c, L * nums)

    assert out.shape == (1, c, fh * fw * nums), out.shape
    assert jnp.allclose(out, ref), "mismatch vs reference gather"

    print("KERNEL_OK")
</pallas_src>

<mosaic_0001>
module attributes {stable_mosaic.version = 11 : i64} {
  func.func @_sample_gather_kernel(%arg0: i32, %arg1: memref<1x128xi32, #tpu.memory_space<vmem>>, %arg2: memref<64x128xf32, #tpu.memory_space<vmem>>, %arg3: memref<4x128xf32, #tpu.memory_space<vmem>>) attributes {dimension_semantics = [#tpu.dimension_semantics<parallel>], iteration_bounds = array<i64: 1>, scalar_prefetch = 0 : i64, scratch_operands = 0 : i64, tpu.core_type = #tpu.core_type<tc>, window_params = [{transform_indices = @transform_0, window_bounds = array<i64: 1, 128>}, {transform_indices = @transform_1, window_bounds = array<i64: 64, 128>}, {transform_indices = @transform_2, window_bounds = array<i64: 4, 128>}]} {
    %c0 = arith.constant 0 : index
    %c0_0 = arith.constant 0 : index
    %0 = vector.load %arg1[%c0, %c0_0] : memref<1x128xi32, #tpu.memory_space<vmem>>, vector<1x128xi32>
    %1 = vector.shape_cast %0 : vector<1x128xi32> to vector<1x128xi32>
    %2 = vector.broadcast %1 : vector<1x128xi32> to vector<4x128xi32>
    %c0_1 = arith.constant 0 : index
    %c0_2 = arith.constant 0 : index
    %3 = vector.load %arg2[%c0_1, %c0_2] : memref<64x128xf32, #tpu.memory_space<vmem>>, vector<4x128xf32>
    %c1_i32 = arith.constant 1 : i32
    %4 = vector.broadcast %c1_i32 : i32 to vector<4x128xi32>
    %5 = arith.cmpi eq, %2, %4 : vector<4x128xi32>
    %c4 = arith.constant 4 : index
    %c0_3 = arith.constant 0 : index
    %6 = vector.load %arg2[%c4, %c0_3] : memref<64x128xf32, #tpu.memory_space<vmem>>, vector<4x128xf32>
    %7 = arith.select %5, %6, %3 : vector<4x128xi1>, vector<4x128xf32>
    %c2_i32 = arith.constant 2 : i32
    %8 = vector.broadcast %c2_i32 : i32 to vector<4x128xi32>
    %9 = arith.cmpi eq, %2, %8 : vector<4x128xi32>
    %c8 = arith.constant 8 : index
    %c0_4 = arith.constant 0 : index
    %10 = vector.load %arg2[%c8, %c0_4] : memref<64x128xf32, #tpu.memory_space<vmem>>, vector<4x128xf32>
    %11 = arith.select %9, %10, %7 : vector<4x128xi1>, vector<4x128xf32>
    %c3_i32 = arith.constant 3 : i32
    %12 = vector.broadcast %c3_i32 : i32 to vector<4x128xi32>
    %13 = arith.cmpi eq, %2, %12 : vector<4x128xi32>
    %c12 = arith.constant 12 : index
    %c0_5 = arith.constant 0 : index
    %14 = vector.load %arg2[%c12, %c0_5] : memref<64x128xf32, #tpu.memory_space<vmem>>, vector<4x128xf32>
    %15 = arith.select %13, %14, %11 : vector<4x128xi1>, vector<4x128xf32>
    %c4_i32 = arith.constant 4 : i32
    %16 = vector.broadcast %c4_i32 : i32 to vector<4x128xi32>
    %17 = arith.cmpi eq, %2, %16 : vector<4x128xi32>
    %c16 = arith.constant 16 : index
    %c0_6 = arith.constant 0 : index
    %18 = vector.load %arg2[%c16, %c0_6] : memref<64x128xf32, #tpu.memory_space<vmem>>, vector<4x128xf32>
    %19 = arith.select %17, %18, %15 : vector<4x128xi1>, vector<4x128xf32>
    %c5_i32 = arith.constant 5 : i32
    %20 = vector.broadcast %c5_i32 : i32 to vector<4x128xi32>
    %21 = arith.cmpi eq, %2, %20 : vector<4x128xi32>
    %c20 = arith.constant 20 : index
    %c0_7 = arith.constant 0 : index
    %22 = vector.load %arg2[%c20, %c0_7] : memref<64x128xf32, #tpu.memory_space<vmem>>, vector<4x128xf32>
    %23 = arith.select %21, %22, %19 : vector<4x128xi1>, vector<4x128xf32>
    %c6_i32 = arith.constant 6 : i32
    %24 = vector.broadcast %c6_i32 : i32 to vector<4x128xi32>
    %25 = arith.cmpi eq, %2, %24 : vector<4x128xi32>
    %c24 = arith.constant 24 : index
    %c0_8 = arith.constant 0 : index
    %26 = vector.load %arg2[%c24, %c0_8] : memref<64x128xf32, #tpu.memory_space<vmem>>, vector<4x128xf32>
    %27 = arith.select %25, %26, %23 : vector<4x128xi1>, vector<4x128xf32>
    %c7_i32 = arith.constant 7 : i32
    %28 = vector.broadcast %c7_i32 : i32 to vector<4x128xi32>
    %29 = arith.cmpi eq, %2, %28 : vector<4x128xi32>
    %c28 = arith.constant 28 : index
    %c0_9 = arith.constant 0 : index
    %30 = vector.load %arg2[%c28, %c0_9] : memref<64x128xf32, #tpu.memory_space<vmem>>, vector<4x128xf32>
    %31 = arith.select %29, %30, %27 : vector<4x128xi1>, vector<4x128xf32>
    %c8_i32 = arith.constant 8 : i32
    %32 = vector.broadcast %c8_i32 : i32 to vector<4x128xi32>
    %33 = arith.cmpi eq, %2, %32 : vector<4x128xi32>
    %c32 = arith.constant 32 : index
    %c0_10 = arith.constant 0 : index
    %34 = vector.load %arg2[%c32, %c0_10] : memref<64x128xf32, #tpu.memory_space<vmem>>, vector<4x128xf32>
    %35 = arith.select %33, %34, %31 : vector<4x128xi1>, vector<4x128xf32>
    %c9_i32 = arith.constant 9 : i32
    %36 = vector.broadcast %c9_i32 : i32 to vector<4x128xi32>
    %37 = arith.cmpi eq, %2, %36 : vector<4x128xi32>
    %c36 = arith.constant 36 : index
    %c0_11 = arith.constant 0 : index
    %38 = vector.load %arg2[%c36, %c0_11] : memref<64x128xf32, #tpu.memory_space<vmem>>, vector<4x128xf32>
    %39 = arith.select %37, %38, %35 : vector<4x128xi1>, vector<4x128xf32>
    %c10_i32 = arith.constant 10 : i32
    %40 = vector.broadcast %c10_i32 : i32 to vector<4x128xi32>
    %41 = arith.cmpi eq, %2, %40 : vector<4x128xi32>
    %c40 = arith.constant 40 : index
    %c0_12 = arith.constant 0 : index
    %42 = vector.load %arg2[%c40, %c0_12] : memref<64x128xf32, #tpu.memory_space<vmem>>, vector<4x128xf32>
    %43 = arith.select %41, %42, %39 : vector<4x128xi1>, vector<4x128xf32>
    %c11_i32 = arith.constant 11 : i32
    %44 = vector.broadcast %c11_i32 : i32 to vector<4x128xi32>
    %45 = arith.cmpi eq, %2, %44 : vector<4x128xi32>
    %c44 = arith.constant 44 : index
    %c0_13 = arith.constant 0 : index
    %46 = vector.load %arg2[%c44, %c0_13] : memref<64x128xf32, #tpu.memory_space<vmem>>, vector<4x128xf32>
    %47 = arith.select %45, %46, %43 : vector<4x128xi1>, vector<4x128xf32>
    %c12_i32 = arith.constant 12 : i32
    %48 = vector.broadcast %c12_i32 : i32 to vector<4x128xi32>
    %49 = arith.cmpi eq, %2, %48 : vector<4x128xi32>
    %c48 = arith.constant 48 : index
    %c0_14 = arith.constant 0 : index
    %50 = vector.load %arg2[%c48, %c0_14] : memref<64x128xf32, #tpu.memory_space<vmem>>, vector<4x128xf32>
    %51 = arith.select %49, %50, %47 : vector<4x128xi1>, vector<4x128xf32>
    %c13_i32 = arith.constant 13 : i32
    %52 = vector.broadcast %c13_i32 : i32 to vector<4x128xi32>
    %53 = arith.cmpi eq, %2, %52 : vector<4x128xi32>
    %c52 = arith.constant 52 : index
    %c0_15 = arith.constant 0 : index
    %54 = vector.load %arg2[%c52, %c0_15] : memref<64x128xf32, #tpu.memory_space<vmem>>, vector<4x128xf32>
    %55 = arith.select %53, %54, %51 : vector<4x128xi1>, vector<4x128xf32>
    %c14_i32 = arith.constant 14 : i32
    %56 = vector.broadcast %c14_i32 : i32 to vector<4x128xi32>
    %57 = arith.cmpi eq, %2, %56 : vector<4x128xi32>
    %c56 = arith.constant 56 : index
    %c0_16 = arith.constant 0 : index
    %58 = vector.load %arg2[%c56, %c0_16] : memref<64x128xf32, #tpu.memory_space<vmem>>, vector<4x128xf32>
    %59 = arith.select %57, %58, %55 : vector<4x128xi1>, vector<4x128xf32>
    %c15_i32 = arith.constant 15 : i32
    %60 = vector.broadcast %c15_i32 : i32 to vector<4x128xi32>
    %61 = arith.cmpi eq, %2, %60 : vector<4x128xi32>
    %c60 = arith.constant 60 : index
    %c0_17 = arith.constant 0 : index
    %62 = vector.load %arg2[%c60, %c0_17] : memref<64x128xf32, #tpu.memory_space<vmem>>, vector<4x128xf32>
    %63 = arith.select %61, %62, %59 : vector<4x128xi1>, vector<4x128xf32>
    %c0_18 = arith.constant 0 : index
    %c0_19 = arith.constant 0 : index
    %64 = vector.load %arg3[%c0_18, %c0_19] : memref<4x128xf32, #tpu.memory_space<vmem>>, vector<4x128xf32>
    tpu.vector_store %arg3[%c0_18, %c0_19], %63 {strides = array<i32>} : memref<4x128xf32, #tpu.memory_space<vmem>>, vector<4x128xf32>,
    return
  }
  func.func @transform_0(%arg0: i32) -> (i32, i32) {
    %c0_i32 = arith.constant 0 : i32
    %c0_i32_0 = arith.constant 0 : i32
    return %c0_i32, %arg0 : i32, i32
  }
  func.func @transform_1(%arg0: i32) -> (i32, i32) {
    %c0_i32 = arith.constant 0 : i32
    %c0_i32_0 = arith.constant 0 : i32
    return %c0_i32, %arg0 : i32, i32
  }
  func.func @transform_2(%arg0: i32) -> (i32, i32) {
    %c0_i32 = arith.constant 0 : i32
    %c0_i32_0 = arith.constant 0 : i32
    return %c0_i32, %arg0 : i32, i32
  }
}

</mosaic_0001>

<llo_original>
// kernel: squeeze.17
$region0: #{squeeze.17}
  %s0 = inlined_call_operand.hbm [shape: f32[1,4,16,16], index: 0, kind: input, shape index: {}]
  %s1 = inlined_call_operand.vmem [shape: f32[4,4,4,4,4], index: 1, kind: output, shape index: {}]
  $region1: #{squeeze.17} parent=0
    #allocation0 [shape = 'u8[32768]{0}', space=vmem, size = 0x8000, scoped, tag = 'operand span for operand 0']
    #allocation1 [shape = 's32[1]{0}', space=sflag, size = 0x4, scoped, tag = 'scoped memory for squeeze.17']
    #allocation2 [shape = 'u8[262144]{0}', space=vmem, size = 0x40000, scoped, tag = 'scoped mem for output reshape']
    %2 = vsyncpa [#allocation1], 0
    %4 = vsyncadd [#allocation1], 0
    %s6 = sshll.u32 %s0, 4
    %s7 = int_to_ptr.hbm [resolvable:$true] %s6
    %s8 = sshll.u32 [#allocation0], 4
    %s9 = int_to_ptr.vmem [resolvable:$true] %s8
    %11 = dma.hbm_to_vmem [thread:$0]  %s7, 1024, %s9, [#allocation1]
    %13 = dma.done [#allocation1], 1024
    %v14 = vld [vmem:[#allocation0] sm:$0xff]
    %vm15 = vcmask 31744
    %16 = vst.msk [vmem:[#allocation2] ss:$8 sm:$0xf] %vm15, %v14
    %17 = vst.msk [vmem:[#allocation2] ss:$8 sm:$0xf0] %vm15, %v14
    %s18 = scalar_lea.vmem [#allocation0], 8
    %v19 = vld [vmem:[%s18] sm:$0xff]
    %vm20 = vcmask 31744
    %s21 = scalar_lea.vmem [#allocation2], 64
    %22 = vst.msk [vmem:[%s21] ss:$8 sm:$0xf] %vm20, %v19
    %s23 = scalar_lea.vmem [#allocation2], 64
    %24 = vst.msk [vmem:[%s23] ss:$8 sm:$0xf0] %vm20, %v19
    %s25 = scalar_lea.vmem [#allocation0], 16
    %v26 = vld [vmem:[%s25] sm:$0xff]
    %vm27 = vcmask 31744
    %s28 = scalar_lea.vmem [#allocation2], 128
    %29 = vst.msk [vmem:[%s28] ss:$8 sm:$0xf] %vm27, %v26
    %s30 = scalar_lea.vmem [#allocation2], 128
    %31 = vst.msk [vmem:[%s30] ss:$8 sm:$0xf0] %vm27, %v26
    %s32 = scalar_lea.vmem [#allocation0], 24
    %v33 = vld [vmem:[%s32] sm:$0xff]
    %vm34 = vcmask 31744
    %s35 = scalar_lea.vmem [#allocation2], 192
    %36 = vst.msk [vmem:[%s35] ss:$8 sm:$0xf] %vm34, %v33
    %s37 = scalar_lea.vmem [#allocation2], 192
    %38 = vst.msk [vmem:[%s37] ss:$8 sm:$0xf0] %vm34, %v33
    %s39 = scalar_lea.vmem [#allocation0], 32
    %v40 = vld [vmem:[%s39] sm:$0xff]
    %vm41 = vcmask 31744
    %s42 = scalar_lea.vmem [#allocation2], 256
    %43 = vst.msk [vmem:[%s42] ss:$8 sm:$0xf] %vm41, %v40
    %s44 = scalar_lea.vmem [#allocation2], 256
    %45 = vst.msk [vmem:[%s44] ss:$8 sm:$0xf0] %vm41, %v40
    %s46 = scalar_lea.vmem [#allocation0], 40
    %v47 = vld [vmem:[%s46] sm:$0xff]
    %vm48 = vcmask 31744
    %s49 = scalar_lea.vmem [#allocation2], 320
    %50 = vst.msk [vmem:[%s49] ss:$8 sm:$0xf] %vm48, %v47
    %s51 = scalar_lea.vmem [#allocation2], 320
    %52 = vst.msk [vmem:[%s51] ss:$8 sm:$0xf0] %vm48, %v47
    %s53 = scalar_lea.vmem [#allocation0], 48
    %v54 = vld [vmem:[%s53] sm:$0xff]
    %vm55 = vcmask 31744
    %s56 = scalar_lea.vmem [#allocation2], 384
    %57 = vst.msk [vmem:[%s56] ss:$8 sm:$0xf] %vm55, %v54
    %s58 = scalar_lea.vmem [#allocation2], 384
    %59 = vst.msk [vmem:[%s58] ss:$8 sm:$0xf0] %vm55, %v54
    %s60 = scalar_lea.vmem [#allocation0], 56
    %v61 = vld [vmem:[%s60] sm:$0xff]
    %vm62 = vcmask 31744
    %s63 = scalar_lea.vmem [#allocation2], 448
    %64 = vst.msk [vmem:[%s63] ss:$8 sm:$0xf] %vm62, %v61
    %s65 = scalar_lea.vmem [#allocation2], 448
    %66 = vst.msk [vmem:[%s65] ss:$8 sm:$0xf0] %vm62, %v61
    %v67 = vld [vmem:[#allocation0] sm:$0xff]
    %68 = vrot.lane.b32.xlu0 %v67, 124
    %v69 = vpop.permute.xlu0 %68
    %vm70 = vcmask 31744
    %s71 = scalar_lea.vmem [#allocation2], 1
    %72 = vst.msk [vmem:[%s71] ss:$8 sm:$0xf] %vm70, %v69
    %s73 = scalar_lea.vmem [#allocation2], 1
    %74 = vst.msk [vmem:[%s73] ss:$8 sm:$0xf0] %vm70, %v69
    %s75 = scalar_lea.vmem [#allocation0], 8
    %v76 = vld [vmem:[%s75] sm:$0xff]
    %77 = vrot.lane.b32.xlu0 %v76, 124
    %v78 = vpop.permute.xlu0 %77
    %vm79 = vcmask 31744
    %s80 = scalar_lea.vmem [#allocation2], 65
    %81 = vst.msk [vmem:[%s80] ss:$8 sm:$0xf] %vm79, %v78
    %s82 = scalar_lea.vmem [#allocation2], 65
    %83 = vst.msk [vmem:[%s82] ss:$8 sm:$0xf0] %vm79, %v78
    %s84 = scalar_lea.vmem [#allocation0], 16
    %v85 = vld [vmem:[%s84] sm:$0xff]
    %86 = vrot.lane.b32.xlu0 %v85, 124
    %v87 = vpop.permute.xlu0 %86
    %vm88 = vcmask 31744
    %s89 = scalar_lea.vmem [#allocation2], 129
    %90 = vst.msk [vmem:[%s89] ss:$8 sm:$0xf] %vm88, %v87
    %s91 = scalar_lea.vmem [#allocation2], 129
    %92 = vst.msk [vmem:[%s91] ss:$8 sm:$0xf0] %vm88, %v87
    %s93 = scalar_lea.vmem [#allocation0], 24
    %v94 = vld [vmem:[%s93] sm:$0xff]
    %95 = vrot.lane.b32.xlu0 %v94, 124
    %v96 = vpop.permute.xlu0 %95
    %vm97 = vcmask 31744
    %s98 = scalar_lea.vmem [#allocation2], 193
    %99 = vst.msk [vmem:[%s98] ss:$8 sm:$0xf] %vm97, %v96
    %s100 = scalar_lea.vmem [#allocation2], 193
    %101 = vst.msk [vmem:[%s100] ss:$8 sm:$0xf0] %vm97, %v96
    %s102 = scalar_lea.vmem [#allocation0], 32
    %v103 = vld [vmem:[%s102] sm:$0xff]
    %104 = vrot.lane.b32.xlu0 %v103, 124
    %v105 = vpop.permute.xlu0 %104
    %vm106 = vcmask 31744
    %s107 = scalar_lea.vmem [#allocation2], 257
    %108 = vst.msk [vmem:[%s107] ss:$8 sm:$0xf] %vm106, %v105
    %s109 = scalar_lea.vmem [#allocation2], 257
    %110 = vst.msk [vmem:[%s109] ss:$8 sm:$0xf0] %vm106, %v105
    %s111 = scalar_lea.vmem [#allocation0], 40
    %v112 = vld [vmem:[%s111] sm:$0xff]
    %113 = vrot.lane.b32.xlu0 %v112, 124
    %v114 = vpop.permute.xlu0 %113
    %vm115 = vcmask 31744
    %s116 = scalar_lea.vmem [#allocation2], 321
    %117 = vst.msk [vmem:[%s116] ss:$8 sm:$0xf] %vm115, %v114
    %s118 = scalar_lea.vmem [#allocation2], 321
    %119 = vst.msk [vmem:[%s118] ss:$8 sm:$0xf0] %vm115, %v114
    %s120 = scalar_lea.vmem [#allocation0], 48
    %v121 = vld [vmem:[%s120] sm:$0xff]
    %122 = vrot.lane.b32.xlu0 %v121, 124
    %v123 = vpop.permute.xlu0 %122
    %vm124 = vcmask 31744
    %s125 = scalar_lea.vmem [#allocation2], 385
    %126 = vst.msk [vmem:[%s125] ss:$8 sm:$0xf] %vm124, %v123
    %s127 = scalar_lea.vmem [#allocation2], 385
    %128 = vst.msk [vmem:[%s127] ss:$8 sm:$0xf0] %vm124, %v123
    %s129 = scalar_lea.vmem [#allocation0], 56
    %v130 = vld [vmem:[%s129] sm:$0xff]
    %131 = vrot.lane.b32.xlu0 %v130, 124
    %v132 = vpop.permute.xlu0 %131
    %vm133 = vcmask 31744
    %s134 = scalar_lea.vmem [#allocation2], 449
    %135 = vst.msk [vmem:[%s134] ss:$8 sm:$0xf] %vm133, %v132
    %s136 = scalar_lea.vmem [#allocation2], 449
    %137 = vst.msk [vmem:[%s136] ss:$8 sm:$0xf0] %vm133, %v132
    %v138 = vld [vmem:[#allocation0] sm:$0xff]
    %139 = vrot.lane.b32.xlu0 %v138, 120
    %v140 = vpop.permute.xlu0 %139
    %vm141 = vcmask 31744
    %s142 = scalar_lea.vmem [#allocation2], 2
    %143 = vst.msk [vmem:[%s142] ss:$8 sm:$0xf] %vm141, %v140
    %s144 = scalar_lea.vmem [#allocation2], 2
    %145 = vst.msk [vmem:[%s144] ss:$8 sm:$0xf0] %vm141, %v140
    %s146 = scalar_lea.vmem [#allocation0], 8
    %v147 = vld [vmem:[%s146] sm:$0xff]
    %148 = vrot.lane.b32.xlu0 %v147, 120
    %v149 = vpop.permute.xlu0 %148
    %vm150 = vcmask 31744
    %s151 = scalar_lea.vmem [#allocation2], 66
    %152 = vst.msk [vmem:[%s151] ss:$8 sm:$0xf] %vm150, %v149
    %s153 = scalar_lea.vmem [#allocation2], 66
    %154 = vst.msk [vmem:[%s153] ss:$8 sm:$0xf0] %vm150, %v149
    %s155 = scalar_lea.vmem [#allocation0], 16
    %v156 = vld [vmem:[%s155] sm:$0xff]
    %157 = vrot.lane.b32.xlu0 %v156, 120
    %v158 = vpop.permute.xlu0 %157
    %vm159 = vcmask 31744
    %s160 = scalar_lea.vmem [#allocation2], 130
    %161 = vst.msk [vmem:[%s160] ss:$8 sm:$0xf] %vm159, %v158
    %s162 = scalar_lea.vmem [#allocation2], 130
    %163 = vst.msk [vmem:[%s162] ss:$8 sm:$0xf0] %vm159, %v158
    %s164 = scalar_lea.vmem [#allocation0], 24
    %v165 = vld [vmem:[%s164] sm:$0xff]
    %166 = vrot.lane.b32.xlu0 %v165, 120
    %v167 = vpop.permute.xlu0 %166
    %vm168 = vcmask 31744
    %s169 = scalar_lea.vmem [#allocation2], 194
    %170 = vst.msk [vmem:[%s169] ss:$8 sm:$0xf] %vm168, %v167
    %s171 = scalar_lea.vmem [#allocation2], 194
    %172 = vst.msk [vmem:[%s171] ss:$8 sm:$0xf0] %vm168, %v167
    %s173 = scalar_lea.vmem [#allocation0], 32
    %v174 = vld [vmem:[%s173] sm:$0xff]
    %175 = vrot.lane.b32.xlu0 %v174, 120
    %v176 = vpop.permute.xlu0 %175
    %vm177 = vcmask 31744
    %s178 = scalar_lea.vmem [#allocation2], 258
    %179 = vst.msk [vmem:[%s178] ss:$8 sm:$0xf] %vm177, %v176
    %s180 = scalar_lea.vmem [#allocation2], 258
    %181 = vst.msk [vmem:[%s180] ss:$8 sm:$0xf0] %vm177, %v176
    %s182 = scalar_lea.vmem [#allocation0], 40
    %v183 = vld [vmem:[%s182] sm:$0xff]
    %184 = vrot.lane.b32.xlu0 %v183, 120
    %v185 = vpop.permute.xlu0 %184
    %vm186 = vcmask 31744
    %s187 = scalar_lea.vmem [#allocation2], 322
    %188 = vst.msk [vmem:[%s187] ss:$8 sm:$0xf] %vm186, %v185
    %s189 = scalar_lea.vmem [#allocation2], 322
    %190 = vst.msk [vmem:[%s189] ss:$8 sm:$0xf0] %vm186, %v185
    %s191 = scalar_lea.vmem [#allocation0], 48
    %v192 = vld [vmem:[%s191] sm:$0xff]
    %193 = vrot.lane.b32.xlu0 %v192, 120
    %v194 = vpop.permute.xlu0 %193
    %vm195 = vcmask 31744
    %s196 = scalar_lea.vmem [#allocation2], 386
    %197 = vst.msk [vmem:[%s196] ss:$8 sm:$0xf] %vm195, %v194
    %s198 = scalar_lea.vmem [#allocation2], 386
    %199 = vst.msk [vmem:[%s198] ss:$8 sm:$0xf0] %vm195, %v194
    %s200 = scalar_lea.vmem [#allocation0], 56
    %v201 = vld [vmem:[%s200] sm:$0xff]
    %202 = vrot.lane.b32.xlu0 %v201, 120
    %v203 = vpop.permute.xlu0 %202
    %vm204 = vcmask 31744
    %s205 = scalar_lea.vmem [#allocation2], 450
    %206 = vst.msk [vmem:[%s205] ss:$8 sm:$0xf] %vm204, %v203
    %s207 = scalar_lea.vmem [#allocation2], 450
    %208 = vst.msk [vmem:[%s207] ss:$8 sm:$0xf0] %vm204, %v203
    %v209 = vld [vmem:[#allocation0] sm:$0xff]
    %210 = vrot.lane.b32.xlu0 %v209, 116
    %v211 = vpop.permute.xlu0 %210
    %vm212 = vcmask 31744
    %s213 = scalar_lea.vmem [#allocation2], 3
    %214 = vst.msk [vmem:[%s213] ss:$8 sm:$0xf] %vm212, %v211
    %s215 = scalar_lea.vmem [#allocation2], 3
    %216 = vst.msk [vmem:[%s215] ss:$8 sm:$0xf0] %vm212, %v211
    %s217 = scalar_lea.vmem [#allocation0], 8
    %v218 = vld [vmem:[%s217] sm:$0xff]
    %219 = vrot.lane.b32.xlu0 %v218, 116
    %v220 = vpop.permute.xlu0 %219
    %vm221 = vcmask 31744
    %s222 = scalar_lea.vmem [#allocation2], 67
    %223 = vst.msk [vmem:[%s222] ss:$8 sm:$0xf] %vm221, %v220
    %s224 = scalar_lea.vmem [#allocation2], 67
    %225 = vst.msk [vmem:[%s224] ss:$8 sm:$0xf0] %vm221, %v220
    %s226 = scalar_lea.vmem [#allocation0], 16
    %v227 = vld [vmem:[%s226] sm:$0xff]
    %228 = vrot.lane.b32.xlu0 %v227, 116
    %v229 = vpop.permute.xlu0 %228
    %vm230 = vcmask 31744
    %s231 = scalar_lea.vmem [#allocation2], 131
    %232 = vst.msk [vmem:[%s231] ss:$8 sm:$0xf] %vm230, %v229
    %s233 = scalar_lea.vmem [#allocation2], 131
    %234 = vst.msk [vmem:[%s233] ss:$8 sm:$0xf0] %vm230, %v229
    %s235 = scalar_lea.vmem [#allocation0], 24
    %v236 = vld [vmem:[%s235] sm:$0xff]
    %237 = vrot.lane.b32.xlu0 %v236, 116
    %v238 = vpop.permute.xlu0 %237
    %vm239 = vcmask 31744
    %s240 = scalar_lea.vmem [#allocation2], 195
    %241 = vst.msk [vmem:[%s240] ss:$8 sm:$0xf] %vm239, %v238
    %s242 = scalar_lea.vmem [#allocation2], 195
    %243 = vst.msk [vmem:[%s242] ss:$8 sm:$0xf0] %vm239, %v238
    %s244 = scalar_lea.vmem [#allocation0], 32
    %v245 = vld [vmem:[%s244] sm:$0xff]
    %246 = vrot.lane.b32.xlu0 %v245, 116
    %v247 = vpop.permute.xlu0 %246
    %vm248 = vcmask 31744
    %s249 = scalar_lea.vmem [#allocation2], 259
    %250 = vst.msk [vmem:[%s249] ss:$8 sm:$0xf] %vm248, %v247
    %s251 = scalar_lea.vmem [#allocation2], 259
    %252 = vst.msk [vmem:[%s251] ss:$8 sm:$0xf0] %vm248, %v247
    %s253 = scalar_lea.vmem [#allocation0], 40
    %v254 = vld [vmem:[%s253] sm:$0xff]
    %255 = vrot.lane.b32.xlu0 %v254, 116
    %v256 = vpop.permute.xlu0 %255
    %vm257 = vcmask 31744
    %s258 = scalar_lea.vmem [#allocation2], 323
    %259 = vst.msk [vmem:[%s258] ss:$8 sm:$0xf] %vm257, %v256
    %s260 = scalar_lea.vmem [#allocation2], 323
    %261 = vst.msk [vmem:[%s260] ss:$8 sm:$0xf0] %vm257, %v256
    %s262 = scalar_lea.vmem [#allocation0], 48
    %v263 = vld [vmem:[%s262] sm:$0xff]
    %264 = vrot.lane.b32.xlu0 %v263, 116
    %v265 = vpop.permute.xlu0 %264
    %vm266 = vcmask 31744
    %s267 = scalar_lea.vmem [#allocation2], 387
    %268 = vst.msk [vmem:[%s267] ss:$8 sm:$0xf] %vm266, %v265
    %s269 = scalar_lea.vmem [#allocation2], 387
    %270 = vst.msk [vmem:[%s269] ss:$8 sm:$0xf0] %vm266, %v265
    %s271 = scalar_lea.vmem [#allocation0], 56
    %v272 = vld [vmem:[%s271] sm:$0xff]
    %273 = vrot.lane.b32.xlu0 %v272, 116
    %v274 = vpop.permute.xlu0 %273
    %vm275 = vcmask 31744
    %s276 = scalar_lea.vmem [#allocation2], 451
    %277 = vst.msk [vmem:[%s276] ss:$8 sm:$0xf] %vm275, %v274
    %s278 = scalar_lea.vmem [#allocation2], 451
    %279 = vst.msk [vmem:[%s278] ss:$8 sm:$0xf0] %vm275, %v274
    %s281 = ssub.s32 16, 1
    %v282 = vld [vmem:[#allocation2] sm:%s281]
    %s284 = ssub.s32 16, 1
    %285 = vst [vmem:[%s1] sm:%s284] %v282
    %s286 = scalar_lea.vmem [#allocation2], 8
    %v287 = vld [vmem:[%s286] sm:%s281]
    %s289 = ssub.s32 16, 1
    %s290 = scalar_lea.vmem %s1, 4
    %291 = vst [vmem:[%s290] sm:%s289] %v287
    %s292 = scalar_lea.vmem [#allocation2], 16
    %v293 = vld [vmem:[%s292] sm:%s281]
    %s295 = ssub.s32 16, 1
    %s296 = scalar_lea.vmem %s1, 8
    %297 = vst [vmem:[%s296] sm:%s295] %v293
    %s298 = scalar_lea.vmem [#allocation2], 24
    %v299 = vld [vmem:[%s298] sm:%s281]
    %s301 = ssub.s32 16, 1
    %s302 = scalar_lea.vmem %s1, 12
    %303 = vst [vmem:[%s302] sm:%s301] %v299
    %s304 = scalar_lea.vmem [#allocation2], 32
    %v305 = vld [vmem:[%s304] sm:%s281]
    %s307 = ssub.s32 16, 1
    %s308 = scalar_lea.vmem %s1, 16
    %309 = vst [vmem:[%s308] sm:%s307] %v305
    %s310 = scalar_lea.vmem [#allocation2], 40
    %v311 = vld [vmem:[%s310] sm:%s281]
    %s313 = ssub.s32 16, 1
    %s314 = scalar_lea.vmem %s1, 20
    %315 = vst [vmem:[%s314] sm:%s313] %v311
    %s316 = scalar_lea.vmem [#allocation2], 48
    %v317 = vld [vmem:[%s316] sm:%s281]
    %s319 = ssub.s32 16, 1
    %s320 = scalar_lea.vmem %s1, 24
    %321 = vst [vmem:[%s320] sm:%s319] %v317
    %s322 = scalar_lea.vmem [#allocation2], 56
    %v323 = vld [vmem:[%s322] sm:%s281]
    %s325 = ssub.s32 16, 1
    %s326 = scalar_lea.vmem %s1, 28
    %327 = vst [vmem:[%s326] sm:%s325] %v323
    %s328 = scalar_lea.vmem [#allocation2], 64
    %v329 = vld [vmem:[%s328] sm:%s281]
    %s331 = ssub.s32 16, 1
    %s332 = scalar_lea.vmem %s1, 32
    %333 = vst [vmem:[%s332] sm:%s331] %v329
    %s334 = scalar_lea.vmem [#allocation2], 72
    %v335 = vld [vmem:[%s334] sm:%s281]
    %s337 = ssub.s32 16, 1
    %s338 = scalar_lea.vmem %s1, 36
    %339 = vst [vmem:[%s338] sm:%s337] %v335
    %s340 = scalar_lea.vmem [#allocation2], 80
    %v341 = vld [vmem:[%s340] sm:%s281]
    %s343 = ssub.s32 16, 1
    %s344 = scalar_lea.vmem %s1, 40
    %345 = vst [vmem:[%s344] sm:%s343] %v341
    %s346 = scalar_lea.vmem [#allocation2], 88
    %v347 = vld [vmem:[%s346] sm:%s281]
    %s349 = ssub.s32 16, 1
    %s350 = scalar_lea.vmem %s1, 44
    %351 = vst [vmem:[%s350] sm:%s349] %v347
    %s352 = scalar_lea.vmem [#allocation2], 96
    %v353 = vld [vmem:[%s352] sm:%s281]
    %s355 = ssub.s32 16, 1
    %s356 = scalar_lea.vmem %s1, 48
    %357 = vst [vmem:[%s356] sm:%s355] %v353
    %s358 = scalar_lea.vmem [#allocation2], 104
    %v359 = vld [vmem:[%s358] sm:%s281]
    %s361 = ssub.s32 16, 1
    %s362 = scalar_lea.vmem %s1, 52
    %363 = vst [vmem:[%s362] sm:%s361] %v359
    %s364 = scalar_lea.vmem [#allocation2], 112
    %v365 = vld [vmem:[%s364] sm:%s281]
    %s367 = ssub.s32 16, 1
    %s368 = scalar_lea.vmem %s1, 56
    %369 = vst [vmem:[%s368] sm:%s367] %v365
    %s370 = scalar_lea.vmem [#allocation2], 120
    %v371 = vld [vmem:[%s370] sm:%s281]
    %s373 = ssub.s32 16, 1
    %s374 = scalar_lea.vmem %s1, 60
    %375 = vst [vmem:[%s374] sm:%s373] %v371
    %s376 = scalar_lea.vmem [#allocation2], 128
    %v377 = vld [vmem:[%s376] sm:%s281]
    %s379 = ssub.s32 16, 1
    %s380 = scalar_lea.vmem %s1, 64
    %381 = vst [vmem:[%s380] sm:%s379] %v377
    %s382 = scalar_lea.vmem [#allocation2], 136
    %v383 = vld [vmem:[%s382] sm:%s281]
    %s385 = ssub.s32 16, 1
    %s386 = scalar_lea.vmem %s1, 68
    %387 = vst [vmem:[%s386] sm:%s385] %v383
    %s388 = scalar_lea.vmem [#allocation2], 144
    %v389 = vld [vmem:[%s388] sm:%s281]
    %s391 = ssub.s32 16, 1
    %s392 = scalar_lea.vmem %s1, 72
    %393 = vst [vmem:[%s392] sm:%s391] %v389
    %s394 = scalar_lea.vmem [#allocation2], 152
    %v395 = vld [vmem:[%s394] sm:%s281]
    %s397 = ssub.s32 16, 1
    %s398 = scalar_lea.vmem %s1, 76
    %399 = vst [vmem:[%s398] sm:%s397] %v395
    %s400 = scalar_lea.vmem [#allocation2], 160
    %v401 = vld [vmem:[%s400] sm:%s281]
    %s403 = ssub.s32 16, 1
    %s404 = scalar_lea.vmem %s1, 80
    %405 = vst [vmem:[%s404] sm:%s403] %v401
    %s406 = scalar_lea.vmem [#allocation2], 168
    %v407 = vld [vmem:[%s406] sm:%s281]
    %s409 = ssub.s32 16, 1
    %s410 = scalar_lea.vmem %s1, 84
    %411 = vst [vmem:[%s410] sm:%s409] %v407
    %s412 = scalar_lea.vmem [#allocation2], 176
    %v413 = vld [vmem:[%s412] sm:%s281]
    %s415 = ssub.s32 16, 1
    %s416 = scalar_lea.vmem %s1, 88
    %417 = vst [vmem:[%s416] sm:%s415] %v413
    %s418 = scalar_lea.vmem [#allocation2], 184
    %v419 = vld [vmem:[%s418] sm:%s281]
    %s421 = ssub.s32 16, 1
    %s422 = scalar_lea.vmem %s1, 92
    %423 = vst [vmem:[%s422] sm:%s421] %v419
    %s424 = scalar_lea.vmem [#allocation2], 192
    %v425 = vld [vmem:[%s424] sm:%s281]
    %s427 = ssub.s32 16, 1
    %s428 = scalar_lea.vmem %s1, 96
    %429 = vst [vmem:[%s428] sm:%s427] %v425
    %s430 = scalar_lea.vmem [#allocation2], 200
    %v431 = vld [vmem:[%s430] sm:%s281]
    %s433 = ssub.s32 16, 1
    %s434 = scalar_lea.vmem %s1, 100
    %435 = vst [vmem:[%s434] sm:%s433] %v431
    %s436 = scalar_lea.vmem [#allocation2], 208
    %v437 = vld [vmem:[%s436] sm:%s281]
    %s439 = ssub.s32 16, 1
    %s440 = scalar_lea.vmem %s1, 104
    %441 = vst [vmem:[%s440] sm:%s439] %v437
    %s442 = scalar_lea.vmem [#allocation2], 216
    %v443 = vld [vmem:[%s442] sm:%s281]
    %s445 = ssub.s32 16, 1
    %s446 = scalar_lea.vmem %s1, 108
    %447 = vst [vmem:[%s446] sm:%s445] %v443
    %s448 = scalar_lea.vmem [#allocation2], 224
    %v449 = vld [vmem:[%s448] sm:%s281]
    %s451 = ssub.s32 16, 1
    %s452 = scalar_lea.vmem %s1, 112
    %453 = vst [vmem:[%s452] sm:%s451] %v449
    %s454 = scalar_lea.vmem [#allocation2], 232
    %v455 = vld [vmem:[%s454] sm:%s281]
    %s457 = ssub.s32 16, 1
    %s458 = scalar_lea.vmem %s1, 116
    %459 = vst [vmem:[%s458] sm:%s457] %v455
    %s460 = scalar_lea.vmem [#allocation2], 240
    %v461 = vld [vmem:[%s460] sm:%s281]
    %s463 = ssub.s32 16, 1
    %s464 = scalar_lea.vmem %s1, 120
    %465 = vst [vmem:[%s464] sm:%s463] %v461
    %s466 = scalar_lea.vmem [#allocation2], 248
    %v467 = vld [vmem:[%s466] sm:%s281]
    %s469 = ssub.s32 16, 1
    %s470 = scalar_lea.vmem %s1, 124
    %471 = vst [vmem:[%s470] sm:%s469] %v467
    %s472 = scalar_lea.vmem [#allocation2], 256
    %v473 = vld [vmem:[%s472] sm:%s281]
    %s475 = ssub.s32 16, 1
    %s476 = scalar_lea.vmem %s1, 128
    %477 = vst [vmem:[%s476] sm:%s475] %v473
    %s478 = scalar_lea.vmem [#allocation2], 264
    %v479 = vld [vmem:[%s478] sm:%s281]
    %s481 = ssub.s32 16, 1
    %s482 = scalar_lea.vmem %s1, 132
    %483 = vst [vmem:[%s482] sm:%s481] %v479
    %s484 = scalar_lea.vmem [#allocation2], 272
    %v485 = vld [vmem:[%s484] sm:%s281]
    %s487 = ssub.s32 16, 1
    %s488 = scalar_lea.vmem %s1, 136
    %489 = vst [vmem:[%s488] sm:%s487] %v485
    %s490 = scalar_lea.vmem [#allocation2], 280
    %v491 = vld [vmem:[%s490] sm:%s281]
    %s493 = ssub.s32 16, 1
    %s494 = scalar_lea.vmem %s1, 140
    %495 = vst [vmem:[%s494] sm:%s493] %v491
    %s496 = scalar_lea.vmem [#allocation2], 288
    %v497 = vld [vmem:[%s496] sm:%s281]
    %s499 = ssub.s32 16, 1
    %s500 = scalar_lea.vmem %s1, 144
    %501 = vst [vmem:[%s500] sm:%s499] %v497
    %s502 = scalar_lea.vmem [#allocation2], 296
    %v503 = vld [vmem:[%s502] sm:%s281]
    %s505 = ssub.s32 16, 1
    %s506 = scalar_lea.vmem %s1, 148
    %507 = vst [vmem:[%s506] sm:%s505] %v503
    %s508 = scalar_lea.vmem [#allocation2], 304
    %v509 = vld [vmem:[%s508] sm:%s281]
    %s511 = ssub.s32 16, 1
    %s512 = scalar_lea.vmem %s1, 152
    %513 = vst [vmem:[%s512] sm:%s511] %v509
    %s514 = scalar_lea.vmem [#allocation2], 312
    %v515 = vld [vmem:[%s514] sm:%s281]
    %s517 = ssub.s32 16, 1
    %s518 = scalar_lea.vmem %s1, 156
    %519 = vst [vmem:[%s518] sm:%s517] %v515
    %s520 = scalar_lea.vmem [#allocation2], 320
    %v521 = vld [vmem:[%s520] sm:%s281]
    %s523 = ssub.s32 16, 1
    %s524 = scalar_lea.vmem %s1, 160
    %525 = vst [vmem:[%s524] sm:%s523] %v521
    %s526 = scalar_lea.vmem [#allocation2], 328
    %v527 = vld [vmem:[%s526] sm:%s281]
    %s529 = ssub.s32 16, 1
    %s530 = scalar_lea.vmem %s1, 164
    %531 = vst [vmem:[%s530] sm:%s529] %v527
    %s532 = scalar_lea.vmem [#allocation2], 336
    %v533 = vld [vmem:[%s532] sm:%s281]
    %s535 = ssub.s32 16, 1
    %s536 = scalar_lea.vmem %s1, 168
    %537 = vst [vmem:[%s536] sm:%s535] %v533
    %s538 = scalar_lea.vmem [#allocation2], 344
    %v539 = vld [vmem:[%s538] sm:%s281]
    %s541 = ssub.s32 16, 1
    %s542 = scalar_lea.vmem %s1, 172
    %543 = vst [vmem:[%s542] sm:%s541] %v539
    %s544 = scalar_lea.vmem [#allocation2], 352
    %v545 = vld [vmem:[%s544] sm:%s281]
    %s547 = ssub.s32 16, 1
    %s548 = scalar_lea.vmem %s1, 176
    %549 = vst [vmem:[%s548] sm:%s547] %v545
    %s550 = scalar_lea.vmem [#allocation2], 360
    %v551 = vld [vmem:[%s550] sm:%s281]
    %s553 = ssub.s32 16, 1
    %s554 = scalar_lea.vmem %s1, 180
    %555 = vst [vmem:[%s554] sm:%s553] %v551
    %s556 = scalar_lea.vmem [#allocation2], 368
    %v557 = vld [vmem:[%s556] sm:%s281]
    %s559 = ssub.s32 16, 1
    %s560 = scalar_lea.vmem %s1, 184
    %561 = vst [vmem:[%s560] sm:%s559] %v557
    %s562 = scalar_lea.vmem [#allocation2], 376
    %v563 = vld [vmem:[%s562] sm:%s281]
    %s565 = ssub.s32 16, 1
    %s566 = scalar_lea.vmem %s1, 188
    %567 = vst [vmem:[%s566] sm:%s565] %v563
    %s568 = scalar_lea.vmem [#allocation2], 384
    %v569 = vld [vmem:[%s568] sm:%s281]
    %s571 = ssub.s32 16, 1
    %s572 = scalar_lea.vmem %s1, 192
    %573 = vst [vmem:[%s572] sm:%s571] %v569
    %s574 = scalar_lea.vmem [#allocation2], 392
    %v575 = vld [vmem:[%s574] sm:%s281]
    %s577 = ssub.s32 16, 1
    %s578 = scalar_lea.vmem %s1, 196
    %579 = vst [vmem:[%s578] sm:%s577] %v575
    %s580 = scalar_lea.vmem [#allocation2], 400
    %v581 = vld [vmem:[%s580] sm:%s281]
    %s583 = ssub.s32 16, 1
    %s584 = scalar_lea.vmem %s1, 200
    %585 = vst [vmem:[%s584] sm:%s583] %v581
    %s586 = scalar_lea.vmem [#allocation2], 408
    %v587 = vld [vmem:[%s586] sm:%s281]
    %s589 = ssub.s32 16, 1
    %s590 = scalar_lea.vmem %s1, 204
    %591 = vst [vmem:[%s590] sm:%s589] %v587
    %s592 = scalar_lea.vmem [#allocation2], 416
    %v593 = vld [vmem:[%s592] sm:%s281]
    %s595 = ssub.s32 16, 1
    %s596 = scalar_lea.vmem %s1, 208
    %597 = vst [vmem:[%s596] sm:%s595] %v593
    %s598 = scalar_lea.vmem [#allocation2], 424
    %v599 = vld [vmem:[%s598] sm:%s281]
    %s601 = ssub.s32 16, 1
    %s602 = scalar_lea.vmem %s1, 212
    %603 = vst [vmem:[%s602] sm:%s601] %v599
    %s604 = scalar_lea.vmem [#allocation2], 432
    %v605 = vld [vmem:[%s604] sm:%s281]
    %s607 = ssub.s32 16, 1
    %s608 = scalar_lea.vmem %s1, 216
    %609 = vst [vmem:[%s608] sm:%s607] %v605
    %s610 = scalar_lea.vmem [#allocation2], 440
    %v611 = vld [vmem:[%s610] sm:%s281]
    %s613 = ssub.s32 16, 1
    %s614 = scalar_lea.vmem %s1, 220
    %615 = vst [vmem:[%s614] sm:%s613] %v611
    %s616 = scalar_lea.vmem [#allocation2], 448
    %v617 = vld [vmem:[%s616] sm:%s281]
    %s619 = ssub.s32 16, 1
    %s620 = scalar_lea.vmem %s1, 224
    %621 = vst [vmem:[%s620] sm:%s619] %v617
    %s622 = scalar_lea.vmem [#allocation2], 456
    %v623 = vld [vmem:[%s622] sm:%s281]
    %s625 = ssub.s32 16, 1
    %s626 = scalar_lea.vmem %s1, 228
    %627 = vst [vmem:[%s626] sm:%s625] %v623
    %s628 = scalar_lea.vmem [#allocation2], 464
    %v629 = vld [vmem:[%s628] sm:%s281]
    %s631 = ssub.s32 16, 1
    %s632 = scalar_lea.vmem %s1, 232
    %633 = vst [vmem:[%s632] sm:%s631] %v629
    %s634 = scalar_lea.vmem [#allocation2], 472
    %v635 = vld [vmem:[%s634] sm:%s281]
    %s637 = ssub.s32 16, 1
    %s638 = scalar_lea.vmem %s1, 236
    %639 = vst [vmem:[%s638] sm:%s637] %v635
    %s640 = scalar_lea.vmem [#allocation2], 480
    %v641 = vld [vmem:[%s640] sm:%s281]
    %s643 = ssub.s32 16, 1
    %s644 = scalar_lea.vmem %s1, 240
    %645 = vst [vmem:[%s644] sm:%s643] %v641
    %s646 = scalar_lea.vmem [#allocation2], 488
    %v647 = vld [vmem:[%s646] sm:%s281]
    %s649 = ssub.s32 16, 1
    %s650 = scalar_lea.vmem %s1, 244
    %651 = vst [vmem:[%s650] sm:%s649] %v647
    %s652 = scalar_lea.vmem [#allocation2], 496
    %v653 = vld [vmem:[%s652] sm:%s281]
    %s655 = ssub.s32 16, 1
    %s656 = scalar_lea.vmem %s1, 248
    %657 = vst [vmem:[%s656] sm:%s655] %v653
    %s658 = scalar_lea.vmem [#allocation2], 504
    %v659 = vld [vmem:[%s658] sm:%s281]
    %s661 = ssub.s32 16, 1
    %s662 = scalar_lea.vmem %s1, 252
    %663 = vst [vmem:[%s662] sm:%s661] %v659
    %664 = vsyncpa [#allocation1], 1

// kernel: sparse_random_sampling.1
$region0: #{sparse_random_sampling.1}
  #allocation0 [shape = 'u32[]', space=smem, size = 0x4, offset = 0x4, fixed_abs, tag = 'smem constant byte address 0x4 - core index']
  #allocation1 [shape = 'u32[72,128]{1,0:T(1,128)}', space=vmem, size = 0x9000, scoped, tag = 'internal scratch']
  %s0 = inlined_call_operand.vmem [shape: s32[1,128], index: 0, kind: input, shape index: {}]
  %s1 = inlined_call_operand.vmem [shape: f32[64,128], index: 1, kind: input, shape index: {}]
  %s2 = inlined_call_operand.vmem [shape: f32[4,128], index: 2, kind: output, shape index: {}]
  %s3 = sld [smem:[#allocation0]]
  $region18: #{sparse_random_sampling.1} parent=0
    _
  %s5 = ssub.s32 1, %s3
  %s6 = scalar_select 0, %s5, %s3
  // Predicated region
  $region2: #{sparse_random_sampling.1} parent=0 // pred_check
    _
  $region3: #{sparse_random_sampling.1} parent=0 // pred_check_branch
    %8 = sbr.rel (0) target = $region5
  $region4: #{sparse_random_sampling.1} parent=0 // pred_region
    _
  $region5: #{sparse_random_sampling.1} parent=0 // pred_fallthru
    _
  // Predicated region
  $region6: #{sparse_random_sampling.1} parent=0 // pred_check
    _
  $region7: #{sparse_random_sampling.1} parent=0 // pred_check_branch
    %10 = sbr.rel (0) target = $region9
  $region8: #{sparse_random_sampling.1} parent=0 // pred_region
    _
  $region9: #{sparse_random_sampling.1} parent=0 // pred_fallthru
    _
  %v11 = vld [vmem:[%s0] sm:$0x1]
  %v12 = vperm.slane %v11, 0
  %v13 = vld [vmem:[%s1] sm:$0xf]
  %vm14 = vcmp.eq.s32.totalorder %v12, 1
  %v15 = vld [vmem:[%s1 + $0x4] sm:$0xf]
  %v16 = vsel %vm14, %v15, %v13
  %vm17 = vcmp.eq.s32.totalorder %v12, 2
  %v18 = vld [vmem:[%s1 + $0x8] sm:$0xf]
  %v19 = vsel %vm17, %v18, %v16
  %vm20 = vcmp.eq.s32.totalorder %v12, 3
  %v21 = vld [vmem:[%s1 + $0xc] sm:$0xf]
  %v22 = vsel %vm20, %v21, %v19
  %vm23 = vcmp.eq.s32.totalorder %v12, 4
  %v24 = vld [vmem:[%s1 + $0x10] sm:$0xf]
  %v25 = vsel %vm23, %v24, %v22
  %vm26 = vcmp.eq.s32.totalorder %v12, 5
  %v27 = vld [vmem:[%s1 + $0x14] sm:$0xf]
  %v28 = vsel %vm26, %v27, %v25
  %vm29 = vcmp.eq.s32.totalorder %v12, 6
  %v30 = vld [vmem:[%s1 + $0x18] sm:$0xf]
  %v31 = vsel %vm29, %v30, %v28
  %vm32 = vcmp.eq.s32.totalorder %v12, 7
  %v33 = vld [vmem:[%s1 + $0x1c] sm:$0xf]
  %v34 = vsel %vm32, %v33, %v31
  %vm35 = vcmp.eq.s32.totalorder %v12, 8
  %v36 = vld [vmem:[%s1 + $0x20] sm:$0xf]
  %v37 = vsel %vm35, %v36, %v34
  %vm38 = vcmp.eq.s32.totalorder %v12, 9
  %v39 = vld [vmem:[%s1 + $0x24] sm:$0xf]
  %v40 = vsel %vm38, %v39, %v37
  %vm41 = vcmp.eq.s32.totalorder %v12, 10
  %v42 = vld [vmem:[%s1 + $0x28] sm:$0xf]
  %v43 = vsel %vm41, %v42, %v40
  %vm44 = vcmp.eq.s32.totalorder %v12, 11
  %v45 = vld [vmem:[%s1 + $0x2c] sm:$0xf]
  %v46 = vsel %vm44, %v45, %v43
  %vm47 = vcmp.eq.s32.totalorder %v12, 12
  %v48 = vld [vmem:[%s1 + $0x30] sm:$0xf]
  %v49 = vsel %vm47, %v48, %v46
  %vm50 = vcmp.eq.s32.totalorder %v12, 13
  %v51 = vld [vmem:[%s1 + $0x34] sm:$0xf]
  %v52 = vsel %vm50, %v51, %v49
  %vm53 = vcmp.eq.s32.totalorder %v12, 14
  %v54 = vld [vmem:[%s1 + $0x38] sm:$0xf]
  %v55 = vsel %vm53, %v54, %v52
  %vm56 = vcmp.eq.s32.totalorder %v12, 15
  %v57 = vld [vmem:[%s1 + $0x3c] sm:$0xf]
  %v58 = vsel %vm56, %v57, %v55
  %59 = vst [vmem:[%s2] sm:$0xf] %v58
  // Predicated region
  $region10: #{sparse_random_sampling.1} parent=0 // pred_check
    _
  $region11: #{sparse_random_sampling.1} parent=0 // pred_check_branch
    %61 = sbr.rel (0) target = $region13
  $region12: #{sparse_random_sampling.1} parent=0 // pred_region
    _
  $region13: #{sparse_random_sampling.1} parent=0 // pred_fallthru
    _
  // Predicated region
  $region14: #{sparse_random_sampling.1} parent=0 // pred_check
    _
  $region15: #{sparse_random_sampling.1} parent=0 // pred_check_branch
    %63 = sbr.rel (0) target = $region17
  $region16: #{sparse_random_sampling.1} parent=0 // pred_region
    _
  $region17: #{sparse_random_sampling.1} parent=0 // pred_fallthru
    _

</llo_original>
